<compile_context>
chip_gen: v6e
topology: v6e:2x2x1
jax: 0.10.0
libtpu: 0.0.40
codegen_flags: <defaults>
</compile_context>

<pallas_src>
import functools

import jax
import jax.numpy as jnp
from jax.experimental import pallas as pl
from jax.experimental.pallas import tpu as pltpu


def _round_up(x, m):
    return ((x + m - 1) // m) * m


def _transe_loss_kernel(x_ref, o_ref, *, margin, norm_p, C, total_b, tile_rows):
    """x_ref: (6, TB, dim_p) f32 — [hp, rp, tp, hn, rn, tn] for this batch tile.

    o_ref: (1, 1) f32 accumulator, resident across the batch-reduction grid axis.
    """
    pid = pl.program_id(0)

    @pl.when(pid == 0)
    def _init():
        o_ref[...] = jnp.zeros_like(o_ref)

    hp = x_ref[0]
    rp = x_ref[1]
    tp = x_ref[2]
    hn = x_ref[3]
    rn = x_ref[4]
    tn = x_ref[5]

    d_pos = hp + rp - tp                       # (TB, dim_p)
    d_neg = hn + rn - tn                       # (TB, dim_p)

    if norm_p == 1:
        pos = jnp.sum(jnp.abs(d_pos), axis=1, keepdims=True)          # (TB, 1)
        neg = jnp.sum(jnp.abs(d_neg), axis=1, keepdims=True)
    else:  # p == 2 (torch.norm default style)
        pos = jnp.sqrt(jnp.sum(d_pos * d_pos, axis=1, keepdims=True))
        neg = jnp.sqrt(jnp.sum(d_neg * d_neg, axis=1, keepdims=True))

    # Mask rows beyond the true batch size (zero-padded tail rows would
    # otherwise contribute `margin` each to the ranking loss).
    row_id = jax.lax.broadcasted_iota(jnp.int32, (tile_rows, 1), 0) + pid * tile_rows
    valid = (row_id < total_b).astype(jnp.float32)                     # (TB, 1)

    # MarginRankingLoss(margin, reduction='mean') with y = -1:
    #   mean(max(0, pos - neg + margin))
    ranking = jnp.maximum(pos - neg + margin, 0.0) * valid
    margin_sum = jnp.sum(ranking)

    # scale_loss(emb) = sum(max(sum(emb^2, dim=1) - 1, 0))
    # Zero-padded rows (batch tail and dim padding) give max(0 - 1, 0) = 0,
    # so no extra masking is required here.
    def scale_sum(e):
        return jnp.sum(jnp.maximum(jnp.sum(e * e, axis=1, keepdims=True) - 1.0,
                                   0.0))

    # entity_embedding = ent_emb[cat(h, t, h_c, t_c)]  -> 4B rows
    ent_scale = scale_sum(hp) + scale_sum(tp) + scale_sum(hn) + scale_sum(tn)
    # relation_embedding = rel_emb[cat(r, r_c)]        -> 2B rows
    rel_scale = scale_sum(rp) + scale_sum(rn)

    inv_b = 1.0 / float(total_b)
    tile_total = (margin_sum * inv_b
                  + C * (ent_scale * (0.25 * inv_b) + rel_scale * (0.5 * inv_b)))
    o_ref[...] += tile_total


def transe_forward_pallas(ent_table, rel_table, current_triples,
                          corrupted_triples, *, margin, norm_p, C,
                          block_rows=512):
    """Replicates E.forward(current_triples, corrupted_triples) -> scalar loss."""
    B = int(current_triples.shape[0])
    dim = int(ent_table.shape[1])

    # --- glue: embedding lookups (gather) in plain JAX ---
    h, r, t = current_triples[:, 0], current_triples[:, 1], current_triples[:, 2]
    hc, rc, tc = (corrupted_triples[:, 0], corrupted_triples[:, 1],
                  corrupted_triples[:, 2])

    hp = jnp.take(ent_table, h, axis=0)
    rp = jnp.take(rel_table, r, axis=0)
    tp = jnp.take(ent_table, t, axis=0)
    hn = jnp.take(ent_table, hc, axis=0)
    rn = jnp.take(rel_table, rc, axis=0)
    tn = jnp.take(ent_table, tc, axis=0)

    # Pack the six (B, dim) blocks into one (6, B, dim) array -> single DMA
    # stream, single BlockSpec.
    x = jnp.stack([hp, rp, tp, hn, rn, tn], axis=0).astype(jnp.float32)

    # Lane-dense layout: pad dim to a multiple of 128; tile the batch axis.
    dim_p = _round_up(dim, 128)
    b8 = _round_up(B, 8)
    tb = min(_round_up(int(block_rows), 8), b8)
    padded_b = _round_up(b8, tb)
    x = jnp.pad(x, ((0, 0), (0, padded_b - B), (0, dim_p - dim)))

    grid = (padded_b // tb,)

    kernel = functools.partial(_transe_loss_kernel,
                               margin=float(margin), norm_p=int(norm_p),
                               C=float(C), total_b=B, tile_rows=int(tb))

    tile_bytes = 6 * tb * dim_p * 4
    # Double-buffered single input tile + headroom; safe on v5e (16 MiB scoped
    # default), v6e (128 MiB) and v7x (64 MiB physical).
    vmem_limit = int(min(max(4 * tile_bytes + (2 << 20), 16 << 20), 48 << 20))

    cost = pl.CostEstimate(
        flops=int(20 * B * dim),
        transcendentals=int(2 * B if norm_p != 1 else 0),
        bytes_accessed=int(6 * padded_b * dim_p * 4 + 4),
    )

    out = pl.pallas_call(
        kernel,
        out_shape=jax.ShapeDtypeStruct((1, 1), jnp.float32),
        grid=grid,
        in_specs=[pl.BlockSpec((6, tb, dim_p), lambda i: (0, i, 0))],
        out_specs=pl.BlockSpec((1, 1), lambda i: (0, 0)),
        compiler_params=pltpu.CompilerParams(
            dimension_semantics=("arbitrary",),
            vmem_limit_bytes=vmem_limit,
        ),
        cost_estimate=cost,
    )(x)
    return out[0, 0]


def _xavier_uniform(key, shape):
    fan_in, fan_out = shape[0], shape[1]
    bound = jnp.sqrt(6.0 / (fan_in + fan_out))
    return jax.random.uniform(key, shape, jnp.float32, -bound, bound)


def _row_normalize(w):
    return w / jnp.sqrt(jnp.sum(w * w, axis=1, keepdims=True))


def _reference_forward(ent_table, rel_table, cur, cor, margin, norm_p, C):
    """Pure-JAX reference mirroring the PyTorch module, for verification."""
    def dist(h, r, t):
        d = (jnp.take(ent_table, h, axis=0) + jnp.take(rel_table, r, axis=0)
             - jnp.take(ent_table, t, axis=0))
        if norm_p == 1:
            return jnp.sum(jnp.abs(d), axis=1)
        return jnp.sqrt(jnp.sum(d * d, axis=1))

    h, r, t = cur[:, 0], cur[:, 1], cur[:, 2]
    hc, rc, tc = cor[:, 0], cor[:, 1], cor[:, 2]
    pos = dist(h, r, t)
    neg = dist(hc, rc, tc)
    loss = jnp.mean(jnp.maximum(pos - neg + margin, 0.0))

    ent_emb = jnp.take(ent_table, jnp.concatenate([h, t, hc, tc]), axis=0)
    rel_emb = jnp.take(rel_table, jnp.concatenate([r, rc]), axis=0)

    def scale(e):
        return jnp.sum(jnp.maximum(jnp.sum(e * e, axis=1, keepdims=True) - 1.0,
                                   0.0))

    return loss + C * (scale(ent_emb) / ent_emb.shape[0]
                       + scale(rel_emb) / rel_emb.shape[0])


if __name__ == "__main__":
    entity_num = 32
    relation_num = 8
    dim = 32
    batch = 8
    margin = 1.0
    norm_p = 2
    C = 0.25

    key = jax.random.PRNGKey(0)
    k_ent, k_rel, k_cur, k_cor = jax.random.split(key, 4)

    # Deterministic parameter init matching __data_init: xavier_uniform + L2
    # row-normalization of both embedding tables.
    ent_table = _row_normalize(_xavier_uniform(k_ent, (entity_num, dim)))
    rel_table = _row_normalize(_xavier_uniform(k_rel, (relation_num, dim)))

    # Triples: columns are (head, relation, tail) integer ids.
    cur_h = jax.random.randint(jax.random.fold_in(k_cur, 0), (batch, 1), 0, entity_num)
    cur_r = jax.random.randint(jax.random.fold_in(k_cur, 1), (batch, 1), 0, relation_num)
    cur_t = jax.random.randint(jax.random.fold_in(k_cur, 2), (batch, 1), 0, entity_num)
    cor_h = jax.random.randint(jax.random.fold_in(k_cor, 0), (batch, 1), 0, entity_num)
    cor_r = jax.random.randint(jax.random.fold_in(k_cor, 1), (batch, 1), 0, relation_num)
    cor_t = jax.random.randint(jax.random.fold_in(k_cor, 2), (batch, 1), 0, entity_num)
    current_triples = jnp.concatenate([cur_h, cur_r, cur_t], axis=1).astype(jnp.int32)
    corrupted_triples = jnp.concatenate([cor_h, cor_r, cor_t], axis=1).astype(jnp.int32)

    loss = transe_forward_pallas(ent_table, rel_table, current_triples,
                                 corrupted_triples, margin=margin,
                                 norm_p=norm_p, C=C)
    loss = jax.block_until_ready(loss)

    ref = _reference_forward(ent_table, rel_table, current_triples,
                             corrupted_triples, margin, norm_p, C)
    assert jnp.allclose(loss, ref, rtol=1e-5, atol=1e-5), (loss, ref)

    print("KERNEL_OK")
</pallas_src>

<mosaic_0001>
module attributes {stable_mosaic.version = 11 : i64} {
  func.func @_transe_loss_kernel(%arg0: i32, %arg1: memref<6x8x128xf32, #tpu.memory_space<vmem>>, %arg2: memref<1x1xf32, #tpu.memory_space<vmem>>) attributes {dimension_semantics = [#tpu.dimension_semantics<arbitrary>], iteration_bounds = array<i64: 1>, scalar_prefetch = 0 : i64, scratch_operands = 0 : i64, tpu.core_type = #tpu.core_type<tc>, window_params = [{transform_indices = @transform_0, window_bounds = array<i64: 6, 8, 128>}, {pipeline_mode = #tpu.pipeline_mode<synchronous>, transform_indices = @transform_1, window_bounds = array<i64: 1, 1>}]} {
    %c0_i32 = arith.constant 0 : i32
    %0 = arith.cmpi eq, %arg0, %c0_i32 : i32
    %1 = arith.extui %0 : i1 to i32
    %c0_i32_0 = arith.constant 0 : i32
    %2 = arith.cmpi ne, %1, %c0_i32_0 : i32
    scf.if %2 {
      %cst_50 = arith.constant 0.000000e+00 : f32
      %125 = vector.broadcast %cst_50 : f32 to vector<1x1xf32>
      %c0_51 = arith.constant 0 : index
      %c0_52 = arith.constant 0 : index
      %126 = vector.load %arg2[%c0_51, %c0_52] : memref<1x1xf32, #tpu.memory_space<vmem>>, vector<1x1xf32>
      tpu.vector_store %arg2[%c0_51, %c0_52], %125 {strides = array<i32>} : memref<1x1xf32, #tpu.memory_space<vmem>>, vector<1x1xf32>,
    } else {
    }
    %c0 = arith.constant 0 : index
    %c0_1 = arith.constant 0 : index
    %c0_2 = arith.constant 0 : index
    %3 = vector.load %arg1[%c0, %c0_1, %c0_2] : memref<6x8x128xf32, #tpu.memory_space<vmem>>, vector<1x8x128xf32>
    %4 = vector.shape_cast %3 : vector<1x8x128xf32> to vector<8x128xf32>
    %c1 = arith.constant 1 : index
    %c0_3 = arith.constant 0 : index
    %c0_4 = arith.constant 0 : index
    %5 = vector.load %arg1[%c1, %c0_3, %c0_4] : memref<6x8x128xf32, #tpu.memory_space<vmem>>, vector<1x8x128xf32>
    %6 = vector.shape_cast %5 : vector<1x8x128xf32> to vector<8x128xf32>
    %c2 = arith.constant 2 : index
    %c0_5 = arith.constant 0 : index
    %c0_6 = arith.constant 0 : index
    %7 = vector.load %arg1[%c2, %c0_5, %c0_6] : memref<6x8x128xf32, #tpu.memory_space<vmem>>, vector<1x8x128xf32>
    %8 = vector.shape_cast %7 : vector<1x8x128xf32> to vector<8x128xf32>
    %c3 = arith.constant 3 : index
    %c0_7 = arith.constant 0 : index
    %c0_8 = arith.constant 0 : index
    %9 = vector.load %arg1[%c3, %c0_7, %c0_8] : memref<6x8x128xf32, #tpu.memory_space<vmem>>, vector<1x8x128xf32>
    %10 = vector.shape_cast %9 : vector<1x8x128xf32> to vector<8x128xf32>
    %c4 = arith.constant 4 : index
    %c0_9 = arith.constant 0 : index
    %c0_10 = arith.constant 0 : index
    %11 = vector.load %arg1[%c4, %c0_9, %c0_10] : memref<6x8x128xf32, #tpu.memory_space<vmem>>, vector<1x8x128xf32>
    %12 = vector.shape_cast %11 : vector<1x8x128xf32> to vector<8x128xf32>
    %c5 = arith.constant 5 : index
    %c0_11 = arith.constant 0 : index
    %c0_12 = arith.constant 0 : index
    %13 = vector.load %arg1[%c5, %c0_11, %c0_12] : memref<6x8x128xf32, #tpu.memory_space<vmem>>, vector<1x8x128xf32>
    %14 = vector.shape_cast %13 : vector<1x8x128xf32> to vector<8x128xf32>
    %15 = arith.addf %4, %6 : vector<8x128xf32>
    %16 = arith.subf %15, %8 : vector<8x128xf32>
    %17 = arith.addf %10, %12 : vector<8x128xf32>
    %18 = arith.subf %17, %14 : vector<8x128xf32>
    %19 = arith.mulf %16, %16 : vector<8x128xf32>
    %cst = arith.constant dense<0.000000e+00> : vector<8xf32>
    %20 = vector.multi_reduction <add>, %19, %cst [1] : vector<8x128xf32> to vector<8xf32>
    %21 = vector.shape_cast %20 : vector<8xf32> to vector<8x1xf32>
    %22 = math.sqrt %21 : vector<8x1xf32>
    %23 = arith.mulf %18, %18 : vector<8x128xf32>
    %cst_13 = arith.constant dense<0.000000e+00> : vector<8xf32>
    %24 = vector.multi_reduction <add>, %23, %cst_13 [1] : vector<8x128xf32> to vector<8xf32>
    %25 = vector.shape_cast %24 : vector<8xf32> to vector<8x1xf32>
    %26 = math.sqrt %25 : vector<8x1xf32>
    %27 = tpu.iota {dimensions = array<i32: 0>} : vector<8x1xi32>
    %c8_i32 = arith.constant 8 : i32
    %28 = arith.muli %arg0, %c8_i32 : i32
    %29 = vector.broadcast %28 : i32 to vector<8x1xi32>
    %30 = arith.addi %27, %29 : vector<8x1xi32>
    %c8_i32_14 = arith.constant 8 : i32
    %31 = vector.broadcast %c8_i32_14 : i32 to vector<8x1xi32>
    %32 = arith.cmpi slt, %30, %31 : vector<8x1xi32>
    %33 = arith.extui %32 : vector<8x1xi1> to vector<8x1xi32>
    %34 = arith.sitofp %33 : vector<8x1xi32> to vector<8x1xf32>
    %35 = arith.subf %22, %26 : vector<8x1xf32>
    %cst_15 = arith.constant 1.000000e+00 : f32
    %36 = vector.broadcast %cst_15 : f32 to vector<8x1xf32>
    %37 = arith.addf %35, %36 : vector<8x1xf32>
    %cst_16 = arith.constant 0.000000e+00 : f32
    %38 = vector.broadcast %cst_16 : f32 to vector<8x1xf32>
    %39 = arith.maximumf %37, %38 : vector<8x1xf32>
    %40 = arith.mulf %39, %34 : vector<8x1xf32>
    %41 = vector.shape_cast %40 : vector<8x1xf32> to vector<1x8x1xf32>
    %cst_17 = arith.constant dense<0.000000e+00> : vector<1xf32>
    %42 = vector.multi_reduction <add>, %41, %cst_17 [1, 2] : vector<1x8x1xf32> to vector<1xf32>
    %43 = vector.shape_cast %42 : vector<1xf32> to vector<1x1x1xf32>
    %44 = vector.extract %43[0, 0, 0] : f32 from vector<1x1x1xf32>
    %45 = arith.mulf %4, %4 : vector<8x128xf32>
    %cst_18 = arith.constant dense<0.000000e+00> : vector<8xf32>
    %46 = vector.multi_reduction <add>, %45, %cst_18 [1] : vector<8x128xf32> to vector<8xf32>
    %47 = vector.shape_cast %46 : vector<8xf32> to vector<8x1xf32>
    %cst_19 = arith.constant 1.000000e+00 : f32
    %48 = vector.broadcast %cst_19 : f32 to vector<8x1xf32>
    %49 = arith.subf %47, %48 : vector<8x1xf32>
    %cst_20 = arith.constant 0.000000e+00 : f32
    %50 = vector.broadcast %cst_20 : f32 to vector<8x1xf32>
    %51 = arith.maximumf %49, %50 : vector<8x1xf32>
    %52 = vector.shape_cast %51 : vector<8x1xf32> to vector<1x8x1xf32>
    %cst_21 = arith.constant dense<0.000000e+00> : vector<1xf32>
    %53 = vector.multi_reduction <add>, %52, %cst_21 [1, 2] : vector<1x8x1xf32> to vector<1xf32>
    %54 = vector.shape_cast %53 : vector<1xf32> to vector<1x1x1xf32>
    %55 = vector.extract %54[0, 0, 0] : f32 from vector<1x1x1xf32>
    %56 = arith.mulf %8, %8 : vector<8x128xf32>
    %cst_22 = arith.constant dense<0.000000e+00> : vector<8xf32>
    %57 = vector.multi_reduction <add>, %56, %cst_22 [1] : vector<8x128xf32> to vector<8xf32>
    %58 = vector.shape_cast %57 : vector<8xf32> to vector<8x1xf32>
    %cst_23 = arith.constant 1.000000e+00 : f32
    %59 = vector.broadcast %cst_23 : f32 to vector<8x1xf32>
    %60 = arith.subf %58, %59 : vector<8x1xf32>
    %cst_24 = arith.constant 0.000000e+00 : f32
    %61 = vector.broadcast %cst_24 : f32 to vector<8x1xf32>
    %62 = arith.maximumf %60, %61 : vector<8x1xf32>
    %63 = vector.shape_cast %62 : vector<8x1xf32> to vector<1x8x1xf32>
    %cst_25 = arith.constant dense<0.000000e+00> : vector<1xf32>
    %64 = vector.multi_reduction <add>, %63, %cst_25 [1, 2] : vector<1x8x1xf32> to vector<1xf32>
    %65 = vector.shape_cast %64 : vector<1xf32> to vector<1x1x1xf32>
    %66 = vector.extract %65[0, 0, 0] : f32 from vector<1x1x1xf32>
    %67 = arith.addf %55, %66 : f32
    %68 = arith.mulf %10, %10 : vector<8x128xf32>
    %cst_26 = arith.constant dense<0.000000e+00> : vector<8xf32>
    %69 = vector.multi_reduction <add>, %68, %cst_26 [1] : vector<8x128xf32> to vector<8xf32>
    %70 = vector.shape_cast %69 : vector<8xf32> to vector<8x1xf32>
    %cst_27 = arith.constant 1.000000e+00 : f32
    %71 = vector.broadcast %cst_27 : f32 to vector<8x1xf32>
    %72 = arith.subf %70, %71 : vector<8x1xf32>
    %cst_28 = arith.constant 0.000000e+00 : f32
    %73 = vector.broadcast %cst_28 : f32 to vector<8x1xf32>
    %74 = arith.maximumf %72, %73 : vector<8x1xf32>
    %75 = vector.shape_cast %74 : vector<8x1xf32> to vector<1x8x1xf32>
    %cst_29 = arith.constant dense<0.000000e+00> : vector<1xf32>
    %76 = vector.multi_reduction <add>, %75, %cst_29 [1, 2] : vector<1x8x1xf32> to vector<1xf32>
    %77 = vector.shape_cast %76 : vector<1xf32> to vector<1x1x1xf32>
    %78 = vector.extract %77[0, 0, 0] : f32 from vector<1x1x1xf32>
    %79 = arith.addf %67, %78 : f32
    %80 = arith.mulf %14, %14 : vector<8x128xf32>
    %cst_30 = arith.constant dense<0.000000e+00> : vector<8xf32>
    %81 = vector.multi_reduction <add>, %80, %cst_30 [1] : vector<8x128xf32> to vector<8xf32>
    %82 = vector.shape_cast %81 : vector<8xf32> to vector<8x1xf32>
    %cst_31 = arith.constant 1.000000e+00 : f32
    %83 = vector.broadcast %cst_31 : f32 to vector<8x1xf32>
    %84 = arith.subf %82, %83 : vector<8x1xf32>
    %cst_32 = arith.constant 0.000000e+00 : f32
    %85 = vector.broadcast %cst_32 : f32 to vector<8x1xf32>
    %86 = arith.maximumf %84, %85 : vector<8x1xf32>
    %87 = vector.shape_cast %86 : vector<8x1xf32> to vector<1x8x1xf32>
    %cst_33 = arith.constant dense<0.000000e+00> : vector<1xf32>
    %88 = vector.multi_reduction <add>, %87, %cst_33 [1, 2] : vector<1x8x1xf32> to vector<1xf32>
    %89 = vector.shape_cast %88 : vector<1xf32> to vector<1x1x1xf32>
    %90 = vector.extract %89[0, 0, 0] : f32 from vector<1x1x1xf32>
    %91 = arith.addf %79, %90 : f32
    %92 = arith.mulf %6, %6 : vector<8x128xf32>
    %cst_34 = arith.constant dense<0.000000e+00> : vector<8xf32>
    %93 = vector.multi_reduction <add>, %92, %cst_34 [1] : vector<8x128xf32> to vector<8xf32>
    %94 = vector.shape_cast %93 : vector<8xf32> to vector<8x1xf32>
    %cst_35 = arith.constant 1.000000e+00 : f32
    %95 = vector.broadcast %cst_35 : f32 to vector<8x1xf32>
    %96 = arith.subf %94, %95 : vector<8x1xf32>
    %cst_36 = arith.constant 0.000000e+00 : f32
    %97 = vector.broadcast %cst_36 : f32 to vector<8x1xf32>
    %98 = arith.maximumf %96, %97 : vector<8x1xf32>
    %99 = vector.shape_cast %98 : vector<8x1xf32> to vector<1x8x1xf32>
    %cst_37 = arith.constant dense<0.000000e+00> : vector<1xf32>
    %100 = vector.multi_reduction <add>, %99, %cst_37 [1, 2] : vector<1x8x1xf32> to vector<1xf32>
    %101 = vector.shape_cast %100 : vector<1xf32> to vector<1x1x1xf32>
    %102 = vector.extract %101[0, 0, 0] : f32 from vector<1x1x1xf32>
    %103 = arith.mulf %12, %12 : vector<8x128xf32>
    %cst_38 = arith.constant dense<0.000000e+00> : vector<8xf32>
    %104 = vector.multi_reduction <add>, %103, %cst_38 [1] : vector<8x128xf32> to vector<8xf32>
    %105 = vector.shape_cast %104 : vector<8xf32> to vector<8x1xf32>
    %cst_39 = arith.constant 1.000000e+00 : f32
    %106 = vector.broadcast %cst_39 : f32 to vector<8x1xf32>
    %107 = arith.subf %105, %106 : vector<8x1xf32>
    %cst_40 = arith.constant 0.000000e+00 : f32
    %108 = vector.broadcast %cst_40 : f32 to vector<8x1xf32>
    %109 = arith.maximumf %107, %108 : vector<8x1xf32>
    %110 = vector.shape_cast %109 : vector<8x1xf32> to vector<1x8x1xf32>
    %cst_41 = arith.constant dense<0.000000e+00> : vector<1xf32>
    %111 = vector.multi_reduction <add>, %110, %cst_41 [1, 2] : vector<1x8x1xf32> to vector<1xf32>
    %112 = vector.shape_cast %111 : vector<1xf32> to vector<1x1x1xf32>
    %113 = vector.extract %112[0, 0, 0] : f32 from vector<1x1x1xf32>
    %114 = arith.addf %102, %113 : f32
    %cst_42 = arith.constant 1.250000e-01 : f32
    %115 = arith.mulf %44, %cst_42 : f32
    %cst_43 = arith.constant 3.125000e-02 : f32
    %116 = arith.mulf %91, %cst_43 : f32
    %cst_44 = arith.constant 6.250000e-02 : f32
    %117 = arith.mulf %114, %cst_44 : f32
    %118 = arith.addf %116, %117 : f32
    %cst_45 = arith.constant 2.500000e-01 : f32
    %119 = arith.mulf %cst_45, %118 : f32
    %120 = arith.addf %115, %119 : f32
    %c0_46 = arith.constant 0 : index
    %c0_47 = arith.constant 0 : index
    %121 = vector.load %arg2[%c0_46, %c0_47] : memref<1x1xf32, #tpu.memory_space<vmem>>, vector<1x1xf32>
    %122 = vector.broadcast %120 : f32 to vector<1x1xf32>
    %123 = arith.addf %121, %122 : vector<1x1xf32>
    %c0_48 = arith.constant 0 : index
    %c0_49 = arith.constant 0 : index
    %124 = vector.load %arg2[%c0_48, %c0_49] : memref<1x1xf32, #tpu.memory_space<vmem>>, vector<1x1xf32>
    tpu.vector_store %arg2[%c0_48, %c0_49], %123 {strides = array<i32>} : memref<1x1xf32, #tpu.memory_space<vmem>>, vector<1x1xf32>,
    return
  }
  func.func @transform_0(%arg0: i32) -> (i32, i32, i32) {
    %c0_i32 = arith.constant 0 : i32
    %c0_i32_0 = arith.constant 0 : i32
    %c0_i32_1 = arith.constant 0 : i32
    return %c0_i32, %arg0, %c0_i32_0 : i32, i32, i32
  }
  func.func @transform_1(%arg0: i32) -> (i32, i32) {
    %c0_i32 = arith.constant 0 : i32
    %c0_i32_0 = arith.constant 0 : i32
    %c0_i32_1 = arith.constant 0 : i32
    return %c0_i32, %c0_i32_0 : i32, i32
  }
}

</mosaic_0001>

<llo_original>
// kernel: tpu_custom_call.1
$region0: #{tpu_custom_call.1}
  #allocation0 [shape = 'u32[]', space=smem, size = 0x4, offset = 0x4, fixed_abs, tag = 'smem constant byte address 0x4 - core index']
  #allocation1 [shape = 'u32[144,128]{1,0:T(1,128)}', space=vmem, size = 0x12000, scoped, tag = 'internal scratch']
  %s0 = inlined_call_operand.hbm [shape: f32[6,8,128], index: 0, kind: input, shape index: {}]
  %s1 = inlined_call_operand.hbm [shape: f32[1,1], index: 1, kind: output, shape index: {}]
  %s2 = sld [smem:[#allocation0]]
  $region22: #{tpu_custom_call.1} parent=0
    _
  %s4 = ssub.s32 1, %s2
  %s5 = scalar_select 0, %s4, %s2
  $region1: #{tpu_custom_call.1} parent=0
    #allocation2 [shape = 'u8[24576]{0}', space=vmem, size = 0x6000, scoped, tag = 'input window, operand 0, single buffered']
    #allocation3 [shape = 's32[1]{0}', space=sflag, size = 0x4, scoped, tag = 'scoped memory for tpu_custom_call.1']
    #allocation4 [shape = 's32[1]{0}', space=sflag, size = 0x4, scoped, tag = 'scoped memory for tpu_custom_call.1']
    #allocation5 [shape = 'u8[512]{0}', space=vmem, size = 0x400, scoped, tag = 'output window, operand 0, single buffered']
    %6 = vsyncpa [#allocation3], 0
    %7 = vsyncpa [#allocation4], 0
    // Predicated region
    $region2: #{tpu_custom_call.1} parent=1 // pred_check
      _
    $region3: #{tpu_custom_call.1} parent=1 // pred_check_branch
      %9 = sbr.rel (0) target = $region5
    $region4: #{tpu_custom_call.1} parent=1 // pred_region
      %s11 = ssub.s32 768, 768
      %12 = vsyncadd [#allocation3], %s11
      %s13 = sshll.u32 [#allocation2], 4
      %s14 = int_to_ptr.vmem [resolvable:$true] %s13
      %19 = dma.hbm_to_vmem [thread:$0]  %s0, 768, %s14, [#allocation3], 128, 128, 8
    $region5: #{tpu_custom_call.1} parent=1 // pred_fallthru
      _
    // Predicated region
    $region6: #{tpu_custom_call.1} parent=1 // pred_check
      _
    $region7: #{tpu_custom_call.1} parent=1 // pred_check_branch
      %21 = sbr.rel (0) target = $region9
    $region8: #{tpu_custom_call.1} parent=1 // pred_region
      %22 = dma.done [#allocation3], 768
    $region9: #{tpu_custom_call.1} parent=1 // pred_fallthru
      _
    %p23 = scmp.eq.s32.totalorder 0, 0
    // Predicated region
    $region10: #{tpu_custom_call.1} parent=1 // pred_check
      %p24 = pneg %p23
    $region11: #{tpu_custom_call.1} parent=1 // pred_check_branch
      %26 = sbr.rel (%p24) target = $region13
    $region12: #{tpu_custom_call.1} parent=1 // pred_region
      %vm27 = vcmask 0
      %28 = vst.msk [vmem:[#allocation5] sm:$0x1] %vm27, 0.0
    $region13: #{tpu_custom_call.1} parent=1 // pred_fallthru
      _
    %v29 = vld [vmem:[#allocation2] sm:$0xff]
    %s30 = scalar_lea.vmem [#allocation2], 8
    %v31 = vld [vmem:[%s30] sm:$0xff]
    %s32 = scalar_lea.vmem [#allocation2], 16
    %v33 = vld [vmem:[%s32] sm:$0xff]
    %s34 = scalar_lea.vmem [#allocation2], 24
    %v35 = vld [vmem:[%s34] sm:$0xff]
    %s36 = scalar_lea.vmem [#allocation2], 32
    %v37 = vld [vmem:[%s36] sm:$0xff]
    %s38 = scalar_lea.vmem [#allocation2], 40
    %v39 = vld [vmem:[%s38] sm:$0xff]
    %v40 = vadd.f32 %v29, %v31
    %v41 = vsub.f32 %v40, %v33
    %v42 = vadd.f32 %v35, %v37
    %v43 = vsub.f32 %v42, %v39
    %v44 = vmul.f32 %v41, %v41
    %45 = vadd.xlane.f32.xlu0 %v44
    %v46 = vpop.xlane.xlu0 %45
    %v47 = vrsqrt.pop %v46
    %v48 = vmul.f32 %v46, %v47
    %vm49 = vcmp.eq.f32.partialorder %v46, inf
    %v50 = vsel %vm49, %v46, %v48
    %vm51 = vcmp.eq.f32.partialorder %v46, 0.0
    %v52 = vand.u32 %v46, 2147483648
    %v53 = vsel %vm51, %v52, %v50
    %v54 = vmul.f32 %v43, %v43
    %55 = vadd.xlane.f32.xlu0 %v54
    %v56 = vpop.xlane.xlu0 %55
    %v57 = vrsqrt.pop %v56
    %v58 = vmul.f32 %v56, %v57
    %vm59 = vcmp.eq.f32.partialorder %v56, inf
    %v60 = vsel %vm59, %v56, %v58
    %vm61 = vcmp.eq.f32.partialorder %v56, 0.0
    %v62 = vand.u32 %v56, 2147483648
    %v63 = vsel %vm61, %v62, %v60
    %v64 = vlaneseq
    %v65 = vshrl.u32 %v64, 7
    %s66 = smul.u32 0, 8
    %v67 = vstv %s66
    %v68 = vadd.s32 %v65, %v67
    %vm69 = vcmp.lt.s32.totalorder %v68, 8
    %v70 = vsel %vm69, 1, 0
    %v71 = vcvt.s32.f32 %v70
    %v72 = vsub.f32 %v53, %v63
    %v73 = vadd.f32 %v72, 1.0
    %v74 = vmax.f32 %v73, 0.0
    %v75 = vmul.f32 %v74, %v71
    %vm76 = vcmask 7168
    %v77 = vsel %vm76, %v75, 0.0
    %78 = vadd.xlane.f32.xlu0 %v77
    %v79 = vpop.xlane.xlu0 %78
    %v80 = vrot.slane %v79, 4
    %v81 = vadd.f32 %v79, %v80
    %v82 = vrot.slane %v81, 2
    %v83 = vadd.f32 %v81, %v82
    %v84 = vrot.slane %v83, 1
    %v85 = vadd.f32 %v83, %v84
    %s86 = vtos %v85
    %v87 = vmul.f32 %v29, %v29
    %88 = vadd.xlane.f32.xlu0 %v87
    %v89 = vpop.xlane.xlu0 %88
    %v90 = vsub.f32 %v89, 1.0
    %v91 = vmax.f32 %v90, 0.0
    %v92 = vsel %vm76, %v91, 0.0
    %93 = vadd.xlane.f32.xlu0 %v92
    %v94 = vpop.xlane.xlu0 %93
    %v95 = vrot.slane %v94, 4
    %v96 = vadd.f32 %v94, %v95
    %v97 = vrot.slane %v96, 2
    %v98 = vadd.f32 %v96, %v97
    %v99 = vrot.slane %v98, 1
    %v100 = vadd.f32 %v98, %v99
    %s101 = vtos %v100
    %v102 = vmul.f32 %v33, %v33
    %103 = vadd.xlane.f32.xlu0 %v102
    %v104 = vpop.xlane.xlu0 %103
    %v105 = vsub.f32 %v104, 1.0
    %v106 = vmax.f32 %v105, 0.0
    %v107 = vsel %vm76, %v106, 0.0
    %108 = vadd.xlane.f32.xlu0 %v107
    %v109 = vpop.xlane.xlu0 %108
    %v110 = vrot.slane %v109, 4
    %v111 = vadd.f32 %v109, %v110
    %v112 = vrot.slane %v111, 2
    %v113 = vadd.f32 %v111, %v112
    %v114 = vrot.slane %v113, 1
    %v115 = vadd.f32 %v113, %v114
    %s116 = vtos %v115
    %s117 = sadd.f32 %s101, %s116
    %v118 = vmul.f32 %v35, %v35
    %119 = vadd.xlane.f32.xlu0 %v118
    %v120 = vpop.xlane.xlu0 %119
    %v121 = vsub.f32 %v120, 1.0
    %v122 = vmax.f32 %v121, 0.0
    %v123 = vsel %vm76, %v122, 0.0
    %124 = vadd.xlane.f32.xlu0 %v123
    %v125 = vpop.xlane.xlu0 %124
    %v126 = vrot.slane %v125, 4
    %v127 = vadd.f32 %v125, %v126
    %v128 = vrot.slane %v127, 2
    %v129 = vadd.f32 %v127, %v128
    %v130 = vrot.slane %v129, 1
    %v131 = vadd.f32 %v129, %v130
    %s132 = vtos %v131
    %s133 = sadd.f32 %s117, %s132
    %v134 = vmul.f32 %v39, %v39
    %135 = vadd.xlane.f32.xlu0 %v134
    %v136 = vpop.xlane.xlu0 %135
    %v137 = vsub.f32 %v136, 1.0
    %v138 = vmax.f32 %v137, 0.0
    %v139 = vsel %vm76, %v138, 0.0
    %140 = vadd.xlane.f32.xlu0 %v139
    %v141 = vpop.xlane.xlu0 %140
    %v142 = vrot.slane %v141, 4
    %v143 = vadd.f32 %v141, %v142
    %v144 = vrot.slane %v143, 2
    %v145 = vadd.f32 %v143, %v144
    %v146 = vrot.slane %v145, 1
    %v147 = vadd.f32 %v145, %v146
    %s148 = vtos %v147
    %s149 = sadd.f32 %s133, %s148
    %v150 = vmul.f32 %v31, %v31
    %151 = vadd.xlane.f32.xlu0 %v150
    %v152 = vpop.xlane.xlu0 %151
    %v153 = vsub.f32 %v152, 1.0
    %v154 = vmax.f32 %v153, 0.0
    %v155 = vsel %vm76, %v154, 0.0
    %156 = vadd.xlane.f32.xlu0 %v155
    %v157 = vpop.xlane.xlu0 %156
    %v158 = vrot.slane %v157, 4
    %v159 = vadd.f32 %v157, %v158
    %v160 = vrot.slane %v159, 2
    %v161 = vadd.f32 %v159, %v160
    %v162 = vrot.slane %v161, 1
    %v163 = vadd.f32 %v161, %v162
    %s164 = vtos %v163
    %v165 = vmul.f32 %v37, %v37
    %166 = vadd.xlane.f32.xlu0 %v165
    %v167 = vpop.xlane.xlu0 %166
    %v168 = vsub.f32 %v167, 1.0
    %v169 = vmax.f32 %v168, 0.0
    %v170 = vsel %vm76, %v169, 0.0
    %171 = vadd.xlane.f32.xlu0 %v170
    %v172 = vpop.xlane.xlu0 %171
    %v173 = vrot.slane %v172, 4
    %v174 = vadd.f32 %v172, %v173
    %v175 = vrot.slane %v174, 2
    %v176 = vadd.f32 %v174, %v175
    %v177 = vrot.slane %v176, 1
    %v178 = vadd.f32 %v176, %v177
    %s179 = vtos %v178
    %s180 = sadd.f32 %s164, %s179
    %s181 = smul.f32 %s86, 0.125
    %s182 = smul.f32 %s149, 0.03125
    %s183 = smul.f32 %s180, 0.0625
    %s184 = sadd.f32 %s182, %s183
    %s185 = smul.f32 %s184, 0.25
    %s186 = sadd.f32 %s181, %s185
    %v187 = vld [vmem:[#allocation5] sm:$0x1]
    %v188 = vstv %s186
    %v189 = vadd.f32 %v187, %v188
    %vm190 = vcmask 0
    %191 = vst.msk [vmem:[#allocation5] sm:$0x1] %vm190, %v189
    // Predicated region
    $region14: #{tpu_custom_call.1} parent=1 // pred_check
      _
    $region15: #{tpu_custom_call.1} parent=1 // pred_check_branch
      %193 = sbr.rel (0) target = $region17
    $region16: #{tpu_custom_call.1} parent=1 // pred_region
      %s195 = ssub.s32 16, 16
      %196 = vsyncadd [#allocation4], %s195
      %s198 = sshll.u32 [#allocation5], 4
      %s199 = int_to_ptr.vmem [resolvable:$true] %s198
      %201 = dma.vmem_to_hbm [thread:$0]  %s199, 16, %s1, [#allocation4]
    $region17: #{tpu_custom_call.1} parent=1 // pred_fallthru
      _
    // Predicated region
    $region18: #{tpu_custom_call.1} parent=1 // pred_check
      _
    $region19: #{tpu_custom_call.1} parent=1 // pred_check_branch
      %203 = sbr.rel (0) target = $region21
    $region20: #{tpu_custom_call.1} parent=1 // pred_region
      %204 = dma.done [#allocation4], 16
    $region21: #{tpu_custom_call.1} parent=1 // pred_fallthru
      _
    %205 = vsyncpa [#allocation3], 1
    %206 = vsyncpa [#allocation4], 1

</llo_original>
